<compile_context>
chip_gen: v6e
topology: v6e:2x2x1
jax: 0.10.0
libtpu: 0.0.40
codegen_flags: <defaults>
</compile_context>

<pallas_src>
import jax
import jax.numpy as jnp
from jax.experimental import pallas as pl
from jax.experimental.pallas import tpu as pltpu

LANE = 128
SUBLANE = 8


def _round_up(x, m):
    return (x + m - 1) // m * m


def dann_kernel(x_ref, we_ref, be_ref, wh_ref, bh_ref, enc_ref, head_ref):
    # encoder: Linear(n0, n1) -> Dropout(p=0) [identity] -> ReLU
    x = x_ref[...]
    enc = jnp.dot(x, we_ref[...], preferred_element_type=jnp.float32)
    enc = jnp.maximum(enc + be_ref[...], 0.0)
    enc_ref[...] = enc.astype(enc_ref.dtype)

    # Fused heads: [clf | dclf] in one lane-dense (128-wide) matmul.
    # ReverseLayer.apply(encoded, alpha) is identity in the forward pass.
    # Sigmoid via EUP tanh: sigmoid(z) = 0.5 * (tanh(z/2) + 1).
    logits = jnp.dot(enc, wh_ref[...], preferred_element_type=jnp.float32)
    logits = logits + bh_ref[...]
    head_ref[...] = (0.5 * (jnp.tanh(0.5 * logits) + 1.0)).astype(head_ref.dtype)


def dann_forward(x, params, *, block_b=512):
    """Full DANN forward pass in one Pallas kernel.

    Args:
      x: [B, n0] float32
      params: dict with W_enc [n0,n1], b_enc [1,n1], W_clf [n1,nco],
              b_clf [1,nco], W_dclf [n1,ndo], b_dclf [1,ndo]
    Returns:
      (classification [B,nco], domain [B,ndo], encoded [B,n1])
    """
    B, n0 = x.shape
    n1 = params["W_enc"].shape[1]
    nco = params["W_clf"].shape[1]
    ndo = params["W_dclf"].shape[1]

    n1_p = _round_up(n1, LANE)          # encoder width padded to full vreg lanes
    nh = nco + ndo
    nh_p = _round_up(nh, LANE)          # fused head width padded to 128 lanes

    # Host-side layout plumbing (zero-padded, so kernel math is unchanged):
    #   - encoder weights/bias padded on the output axis,
    #   - both head weights/biases fused into one lane-dense matrix.
    we = jnp.zeros((n0, n1_p), jnp.float32).at[:, :n1].set(params["W_enc"])
    be = jnp.zeros((1, n1_p), jnp.float32).at[:, :n1].set(params["b_enc"])
    wh = jnp.zeros((n1_p, nh_p), jnp.float32)
    wh = wh.at[:n1, :nco].set(params["W_clf"])
    wh = wh.at[:n1, nco:nh].set(params["W_dclf"])
    bh = jnp.zeros((1, nh_p), jnp.float32)
    bh = bh.at[:, :nco].set(params["b_clf"])
    bh = bh.at[:, nco:nh].set(params["b_dclf"])

    # Batch tiling: pipeline over batch tiles, weights stay resident.
    tb = min(block_b, _round_up(B, SUBLANE))
    b_p = _round_up(B, tb)
    if b_p != B:
        x = jnp.zeros((b_p, n0), x.dtype).at[:B, :].set(x)

    grid = (b_p // tb,)

    def resident(shape):
        return pl.BlockSpec(shape, lambda i: (0, 0))

    def batched(shape):
        return pl.BlockSpec(shape, lambda i: (i, 0))

    enc_p, head_p = pl.pallas_call(
        dann_kernel,
        out_shape=(
            jax.ShapeDtypeStruct((b_p, n1_p), jnp.float32),   # padded encoded
            jax.ShapeDtypeStruct((b_p, nh_p), jnp.float32),   # padded [clf|dom]
        ),
        grid=grid,
        in_specs=[
            batched((tb, n0)),         # x tile
            resident((n0, n1_p)),      # W_enc (padded)
            resident((1, n1_p)),       # b_enc (padded)
            resident((n1_p, nh_p)),    # fused head weights
            resident((1, nh_p)),       # fused head biases
        ],
        out_specs=(
            batched((tb, n1_p)),
            batched((tb, nh_p)),
        ),
        compiler_params=pltpu.CompilerParams(
            dimension_semantics=("parallel",),
        ),
    )(x, we, be, wh, bh)

    classification = head_p[:B, :nco]
    domain = head_p[:B, nco:nh]
    encoded = enc_p[:B, :n1]
    return classification, domain, encoded


def init_params(key, n0=310, n1=64, nco=3, ndo=15):
    """Deterministic init mimicking PyTorch nn.Linear (U(-1/sqrt(fan_in), +))."""
    ks = jax.random.split(key, 6)

    def lin(kw, kb, fan_in, fan_out):
        bound = 1.0 / jnp.sqrt(jnp.float32(fan_in))
        W = jax.random.uniform(kw, (fan_in, fan_out), jnp.float32, -bound, bound)
        b = jax.random.uniform(kb, (1, fan_out), jnp.float32, -bound, bound)
        return W, b

    W_enc, b_enc = lin(ks[0], ks[1], n0, n1)
    W_clf, b_clf = lin(ks[2], ks[3], n1, nco)
    W_dclf, b_dclf = lin(ks[4], ks[5], n1, ndo)
    return {"W_enc": W_enc, "b_enc": b_enc,
            "W_clf": W_clf, "b_clf": b_clf,
            "W_dclf": W_dclf, "b_dclf": b_dclf}


def dann_forward_ref(x, p):
    enc = jnp.maximum(x @ p["W_enc"] + p["b_enc"], 0.0)
    clf = jax.nn.sigmoid(enc @ p["W_clf"] + p["b_clf"])
    dom = jax.nn.sigmoid(enc @ p["W_dclf"] + p["b_dclf"])
    return clf, dom, enc


if __name__ == "__main__":
    B, n0, n1, nco, ndo = 8, 310, 64, 3, 15

    key = jax.random.PRNGKey(0)
    kx, kp = jax.random.split(key)
    x = jax.random.normal(kx, (B, n0), dtype=jnp.float32)
    params = init_params(kp, n0=n0, n1=n1, nco=nco, ndo=ndo)

    clf, dom, enc = dann_forward(x, params)
    jax.block_until_ready((clf, dom, enc))

    # Correctness check against pure-JAX reference of the same math.
    # TODO(synk): bf16 weight/activation cast for v5e is intentionally not
    # applied here to keep the f32 tolerance check tight.
    clf_r, dom_r, enc_r = dann_forward_ref(x, params)
    assert clf.shape == (B, nco) and dom.shape == (B, ndo) and enc.shape == (B, n1)
    assert jnp.allclose(clf, clf_r, atol=1e-5, rtol=1e-5)
    assert jnp.allclose(dom, dom_r, atol=1e-5, rtol=1e-5)
    assert jnp.allclose(enc, enc_r, atol=1e-5, rtol=1e-5)

    print("KERNEL_OK")
</pallas_src>

<mosaic_0001>
module attributes {stable_mosaic.version = 11 : i64} {
  func.func @dann_kernel(%arg0: i32, %arg1: memref<8x310xf32, #tpu.memory_space<vmem>>, %arg2: memref<310x128xf32, #tpu.memory_space<vmem>>, %arg3: memref<1x128xf32, #tpu.memory_space<vmem>>, %arg4: memref<128x128xf32, #tpu.memory_space<vmem>>, %arg5: memref<1x128xf32, #tpu.memory_space<vmem>>, %arg6: memref<8x128xf32, #tpu.memory_space<vmem>>, %arg7: memref<8x128xf32, #tpu.memory_space<vmem>>) attributes {dimension_semantics = [#tpu.dimension_semantics<parallel>], iteration_bounds = array<i64: 1>, scalar_prefetch = 0 : i64, scratch_operands = 0 : i64, tpu.core_type = #tpu.core_type<tc>, window_params = [{transform_indices = @transform_0, window_bounds = array<i64: 8, 310>}, {pipeline_mode = #tpu.pipeline_mode<synchronous>, transform_indices = @transform_1, window_bounds = array<i64: 310, 128>}, {pipeline_mode = #tpu.pipeline_mode<synchronous>, transform_indices = @transform_2, window_bounds = array<i64: 1, 128>}, {pipeline_mode = #tpu.pipeline_mode<synchronous>, transform_indices = @transform_3, window_bounds = array<i64: 128, 128>}, {pipeline_mode = #tpu.pipeline_mode<synchronous>, transform_indices = @transform_4, window_bounds = array<i64: 1, 128>}, {transform_indices = @transform_5, window_bounds = array<i64: 8, 128>}, {transform_indices = @transform_6, window_bounds = array<i64: 8, 128>}]} {
    %c0 = arith.constant 0 : index
    %c0_0 = arith.constant 0 : index
    %0 = vector.load %arg1[%c0, %c0_0] : memref<8x310xf32, #tpu.memory_space<vmem>>, vector<8x310xf32>
    %c0_1 = arith.constant 0 : index
    %c0_2 = arith.constant 0 : index
    %1 = vector.load %arg2[%c0_1, %c0_2] : memref<310x128xf32, #tpu.memory_space<vmem>>, vector<310x128xf32>
    %cst = arith.constant dense<0.000000e+00> : vector<8x128xf32>
    %2 = tpu.matmul %0, %1, %cst {dimension_numbers = #tpu.dot_dimension_numbers<[1], [0], [0], [1], [0, 0, 1, 1], [], []>} : vector<8x310xf32>, vector<310x128xf32>, vector<8x128xf32> -> vector<8x128xf32>
    %c0_3 = arith.constant 0 : index
    %c0_4 = arith.constant 0 : index
    %3 = vector.load %arg3[%c0_3, %c0_4] : memref<1x128xf32, #tpu.memory_space<vmem>>, vector<1x128xf32>
    %4 = vector.broadcast %3 : vector<1x128xf32> to vector<8x128xf32>
    %5 = arith.addf %2, %4 : vector<8x128xf32>
    %cst_5 = arith.constant 0.000000e+00 : f32
    %6 = vector.broadcast %cst_5 : f32 to vector<8x128xf32>
    %7 = arith.maximumf %5, %6 : vector<8x128xf32>
    %c0_6 = arith.constant 0 : index
    %c0_7 = arith.constant 0 : index
    %8 = vector.load %arg6[%c0_6, %c0_7] : memref<8x128xf32, #tpu.memory_space<vmem>>, vector<8x128xf32>
    tpu.vector_store %arg6[%c0_6, %c0_7], %7 {strides = array<i32>} : memref<8x128xf32, #tpu.memory_space<vmem>>, vector<8x128xf32>,
    %c0_8 = arith.constant 0 : index
    %c0_9 = arith.constant 0 : index
    %9 = vector.load %arg4[%c0_8, %c0_9] : memref<128x128xf32, #tpu.memory_space<vmem>>, vector<128x128xf32>
    %cst_10 = arith.constant dense<0.000000e+00> : vector<8x128xf32>
    %10 = tpu.matmul %7, %9, %cst_10 {dimension_numbers = #tpu.dot_dimension_numbers<[1], [0], [0], [1], [0, 0, 1, 1], [], []>} : vector<8x128xf32>, vector<128x128xf32>, vector<8x128xf32> -> vector<8x128xf32>
    %c0_11 = arith.constant 0 : index
    %c0_12 = arith.constant 0 : index
    %11 = vector.load %arg5[%c0_11, %c0_12] : memref<1x128xf32, #tpu.memory_space<vmem>>, vector<1x128xf32>
    %12 = vector.broadcast %11 : vector<1x128xf32> to vector<8x128xf32>
    %13 = arith.addf %10, %12 : vector<8x128xf32>
    %cst_13 = arith.constant 5.000000e-01 : f32
    %14 = vector.broadcast %cst_13 : f32 to vector<8x128xf32>
    %15 = arith.mulf %14, %13 : vector<8x128xf32>
    %16 = math.tanh %15 : vector<8x128xf32>
    %cst_14 = arith.constant 1.000000e+00 : f32
    %17 = vector.broadcast %cst_14 : f32 to vector<8x128xf32>
    %18 = arith.addf %16, %17 : vector<8x128xf32>
    %cst_15 = arith.constant 5.000000e-01 : f32
    %19 = vector.broadcast %cst_15 : f32 to vector<8x128xf32>
    %20 = arith.mulf %19, %18 : vector<8x128xf32>
    %c0_16 = arith.constant 0 : index
    %c0_17 = arith.constant 0 : index
    %21 = vector.load %arg7[%c0_16, %c0_17] : memref<8x128xf32, #tpu.memory_space<vmem>>, vector<8x128xf32>
    tpu.vector_store %arg7[%c0_16, %c0_17], %20 {strides = array<i32>} : memref<8x128xf32, #tpu.memory_space<vmem>>, vector<8x128xf32>,
    return
  }
  func.func @transform_0(%arg0: i32) -> (i32, i32) {
    %c0_i32 = arith.constant 0 : i32
    %c0_i32_0 = arith.constant 0 : i32
    return %arg0, %c0_i32 : i32, i32
  }
  func.func @transform_1(%arg0: i32) -> (i32, i32) {
    %c0_i32 = arith.constant 0 : i32
    %c0_i32_0 = arith.constant 0 : i32
    %c0_i32_1 = arith.constant 0 : i32
    return %c0_i32, %c0_i32_0 : i32, i32
  }
  func.func @transform_2(%arg0: i32) -> (i32, i32) {
    %c0_i32 = arith.constant 0 : i32
    %c0_i32_0 = arith.constant 0 : i32
    %c0_i32_1 = arith.constant 0 : i32
    return %c0_i32, %c0_i32_0 : i32, i32
  }
  func.func @transform_3(%arg0: i32) -> (i32, i32) {
    %c0_i32 = arith.constant 0 : i32
    %c0_i32_0 = arith.constant 0 : i32
    %c0_i32_1 = arith.constant 0 : i32
    return %c0_i32, %c0_i32_0 : i32, i32
  }
  func.func @transform_4(%arg0: i32) -> (i32, i32) {
    %c0_i32 = arith.constant 0 : i32
    %c0_i32_0 = arith.constant 0 : i32
    %c0_i32_1 = arith.constant 0 : i32
    return %c0_i32, %c0_i32_0 : i32, i32
  }
  func.func @transform_5(%arg0: i32) -> (i32, i32) {
    %c0_i32 = arith.constant 0 : i32
    %c0_i32_0 = arith.constant 0 : i32
    return %arg0, %c0_i32 : i32, i32
  }
  func.func @transform_6(%arg0: i32) -> (i32, i32) {
    %c0_i32 = arith.constant 0 : i32
    %c0_i32_0 = arith.constant 0 : i32
    return %arg0, %c0_i32 : i32, i32
  }
}

</mosaic_0001>

<llo_original>
// kernel: tpu_custom_call.1
$region0: #{tpu_custom_call.1}
  #allocation0 [shape = 'u32[]', space=smem, size = 0x4, offset = 0x4, fixed_abs, tag = 'smem constant byte address 0x4 - core index']
  #allocation1 [shape = 'u32[144,128]{1,0:T(1,128)}', space=vmem, size = 0x12000, scoped, tag = 'internal scratch']
  %s0 = inlined_call_operand.hbm [shape: f32[8,310], index: 0, kind: input, shape index: {}]
  %s1 = inlined_call_operand.hbm [shape: f32[310,128], index: 1, kind: input, shape index: {}]
  %s2 = inlined_call_operand.vmem [shape: f32[1,128], index: 2, kind: input, shape index: {}]
  %s3 = inlined_call_operand.hbm [shape: f32[128,128], index: 3, kind: input, shape index: {}]
  %s4 = inlined_call_operand.vmem [shape: f32[1,128], index: 4, kind: input, shape index: {}]
  %s5 = inlined_call_operand.hbm [shape: f32[8,128], index: 5, kind: output, shape index: {0}]
  %s6 = inlined_call_operand.hbm [shape: f32[8,128], index: 6, kind: output, shape index: {1}]
  %7 = xla_tuple %s5, %s6
  %s8 = sld [smem:[#allocation0]]
  $region50: #{tpu_custom_call.1} parent=0
    _
  %s10 = ssub.s32 1, %s8
  %s11 = scalar_select 0, %s10, %s8
  $region1: #{tpu_custom_call.1} parent=0
    #allocation2 [shape = 'u8[12288]{0}', space=vmem, size = 0x3000, scoped, tag = 'input window, operand 0, single buffered']
    #allocation3 [shape = 's32[1]{0}', space=sflag, size = 0x4, scoped, tag = 'scoped memory for tpu_custom_call.1']
    #allocation4 [shape = 's32[1]{0}', space=sflag, size = 0x4, scoped, tag = 'scoped memory for tpu_custom_call.1']
    #allocation5 [shape = 'u8[159744]{0}', space=vmem, size = 0x27000, scoped, tag = 'input window, operand 1, single buffered']
    #allocation6 [shape = 's32[1]{0}', space=sflag, size = 0x4, scoped, tag = 'scoped memory for tpu_custom_call.1']
    #allocation7 [shape = 'u8[65536]{0}', space=vmem, size = 0x10000, scoped, tag = 'input window, operand 3, single buffered']
    #allocation8 [shape = 'u8[4096]{0}', space=vmem, size = 0x1000, scoped, tag = 'output window, operand 0, single buffered']
    #allocation9 [shape = 'u8[4096]{0}', space=vmem, size = 0x1000, scoped, tag = 'output window, operand 1, single buffered']
    #allocation10 [shape = 's32[1]{0}', space=sflag, size = 0x4, scoped, tag = 'scoped memory for tpu_custom_call.1']
    %12 = vsyncpa [#allocation3], 0
    %13 = vsyncpa [#allocation6], 0
    %14 = vsyncpa [#allocation4], 0
    %15 = vsyncpa [#allocation10], 0
    // Predicated region
    $region2: #{tpu_custom_call.1} parent=1 // pred_check
      _
    $region3: #{tpu_custom_call.1} parent=1 // pred_check_branch
      %17 = sbr.rel (0) target = $region5
    $region4: #{tpu_custom_call.1} parent=1 // pred_region
      %s19 = ssub.s32 384, 384
      %20 = vsyncadd [#allocation3], %s19
      %s22 = sshll.u32 [#allocation2], 4
      %s23 = int_to_ptr.vmem [resolvable:$true] %s22
      %25 = dma.hbm_to_vmem [thread:$0]  %s0, 384, %s23, [#allocation3]
    $region5: #{tpu_custom_call.1} parent=1 // pred_fallthru
      _
    // Predicated region
    $region6: #{tpu_custom_call.1} parent=1 // pred_check
      _
    $region7: #{tpu_custom_call.1} parent=1 // pred_check_branch
      %27 = sbr.rel (0) target = $region9
    $region8: #{tpu_custom_call.1} parent=1 // pred_region
      %s29 = ssub.s32 4992, 4992
      %30 = vsyncadd [#allocation6], %s29
      %s31 = sshll.u32 [#allocation5], 4
      %s32 = int_to_ptr.vmem [resolvable:$true] %s31
      %37 = dma.hbm_to_vmem [thread:$0]  %s1, 4992, %s32, [#allocation6], 128, 128, 8
    $region9: #{tpu_custom_call.1} parent=1 // pred_fallthru
      _
    // Predicated region
    $region10: #{tpu_custom_call.1} parent=1 // pred_check
      _
    $region11: #{tpu_custom_call.1} parent=1 // pred_check_branch
      %39 = sbr.rel (0) target = $region13
    $region12: #{tpu_custom_call.1} parent=1 // pred_region
      _
    $region13: #{tpu_custom_call.1} parent=1 // pred_fallthru
      _
    // Predicated region
    $region14: #{tpu_custom_call.1} parent=1 // pred_check
      _
    $region15: #{tpu_custom_call.1} parent=1 // pred_check_branch
      %41 = sbr.rel (0) target = $region17
    $region16: #{tpu_custom_call.1} parent=1 // pred_region
      %s43 = ssub.s32 2048, 2048
      %44 = vsyncadd [#allocation6], %s43
      %s45 = sshll.u32 [#allocation7], 4
      %s46 = int_to_ptr.vmem [resolvable:$true] %s45
      %51 = dma.hbm_to_vmem [thread:$0]  %s3, 2048, %s46, [#allocation6], 128, 128, 8
    $region17: #{tpu_custom_call.1} parent=1 // pred_fallthru
      _
    // Predicated region
    $region18: #{tpu_custom_call.1} parent=1 // pred_check
      _
    $region19: #{tpu_custom_call.1} parent=1 // pred_check_branch
      %53 = sbr.rel (0) target = $region21
    $region20: #{tpu_custom_call.1} parent=1 // pred_region
      _
    $region21: #{tpu_custom_call.1} parent=1 // pred_fallthru
      _
    // Predicated region
    $region22: #{tpu_custom_call.1} parent=1 // pred_check
      _
    $region23: #{tpu_custom_call.1} parent=1 // pred_check_branch
      %55 = sbr.rel (0) target = $region25
    $region24: #{tpu_custom_call.1} parent=1 // pred_region
      %56 = dma.done [#allocation3], 384
    $region25: #{tpu_custom_call.1} parent=1 // pred_fallthru
      _
    // Predicated region
    $region26: #{tpu_custom_call.1} parent=1 // pred_check
      _
    $region27: #{tpu_custom_call.1} parent=1 // pred_check_branch
      %58 = sbr.rel (0) target = $region29
    $region28: #{tpu_custom_call.1} parent=1 // pred_region
      %59 = dma.done [#allocation6], 4992
    $region29: #{tpu_custom_call.1} parent=1 // pred_fallthru
      _
    // Predicated region
    $region30: #{tpu_custom_call.1} parent=1 // pred_check
      _
    $region31: #{tpu_custom_call.1} parent=1 // pred_check_branch
      %61 = sbr.rel (0) target = $region33
    $region32: #{tpu_custom_call.1} parent=1 // pred_region
      %62 = dma.done [#allocation6], 2048
    $region33: #{tpu_custom_call.1} parent=1 // pred_fallthru
      _
    %v63 = vld [vmem:[#allocation2] sm:$0xff]
    %v64 = vld [vmem:[#allocation2 + $0x8] sm:$0xff]
    %v65 = vld [vmem:[#allocation2 + $0x10] sm:$0xff]
    %v66 = vld [vmem:[#allocation5] sm:$0xff]
    %v67 = vld [vmem:[#allocation5 + $0x8] sm:$0xff]
    %v68 = vld [vmem:[#allocation5 + $0x10] sm:$0xff]
    %v69 = vld [vmem:[#allocation5 + $0x18] sm:$0xff]
    %v70 = vld [vmem:[#allocation5 + $0x20] sm:$0xff]
    %v71 = vld [vmem:[#allocation5 + $0x28] sm:$0xff]
    %v72 = vld [vmem:[#allocation5 + $0x30] sm:$0xff]
    %v73 = vld [vmem:[#allocation5 + $0x38] sm:$0xff]
    %v74 = vld [vmem:[#allocation5 + $0x40] sm:$0xff]
    %v75 = vld [vmem:[#allocation5 + $0x48] sm:$0xff]
    %v76 = vld [vmem:[#allocation5 + $0x50] sm:$0xff]
    %v77 = vld [vmem:[#allocation5 + $0x58] sm:$0xff]
    %v78 = vld [vmem:[#allocation5 + $0x60] sm:$0xff]
    %v79 = vld [vmem:[#allocation5 + $0x68] sm:$0xff]
    %v80 = vld [vmem:[#allocation5 + $0x70] sm:$0xff]
    %v81 = vld [vmem:[#allocation5 + $0x78] sm:$0xff]
    %v82 = vld [vmem:[#allocation5 + $0x80] sm:$0xff]
    %v83 = vld [vmem:[#allocation5 + $0x88] sm:$0xff]
    %v84 = vld [vmem:[#allocation5 + $0x90] sm:$0xff]
    %v85 = vld [vmem:[#allocation5 + $0x98] sm:$0xff]
    %v86 = vld [vmem:[#allocation5 + $0xa0] sm:$0xff]
    %v87 = vld [vmem:[#allocation5 + $0xa8] sm:$0xff]
    %v88 = vld [vmem:[#allocation5 + $0xb0] sm:$0xff]
    %v89 = vld [vmem:[#allocation5 + $0xb8] sm:$0xff]
    %v90 = vld [vmem:[#allocation5 + $0xc0] sm:$0xff]
    %v91 = vld [vmem:[#allocation5 + $0xc8] sm:$0xff]
    %v92 = vld [vmem:[#allocation5 + $0xd0] sm:$0xff]
    %v93 = vld [vmem:[#allocation5 + $0xd8] sm:$0xff]
    %v94 = vld [vmem:[#allocation5 + $0xe0] sm:$0xff]
    %v95 = vld [vmem:[#allocation5 + $0xe8] sm:$0xff]
    %v96 = vld [vmem:[#allocation5 + $0xf0] sm:$0xff]
    %v97 = vld [vmem:[#allocation5 + $0xf8] sm:$0xff]
    %v98 = vld [vmem:[#allocation5 + $0x100] sm:$0xff]
    %v99 = vld [vmem:[#allocation5 + $0x108] sm:$0xff]
    %v100 = vld [vmem:[#allocation5 + $0x110] sm:$0xff]
    %v101 = vld [vmem:[#allocation5 + $0x118] sm:$0xff]
    %v102 = vld [vmem:[#allocation5 + $0x120] sm:$0xff]
    %v103 = vld [vmem:[#allocation5 + $0x128] sm:$0xff]
    %v104 = vld [vmem:[#allocation5 + $0x130] sm:$0x3f]
    %v105 = vld [vmem:[%s2] sm:$0x1]
    %v107 = vlaneseq
    %v108 = vshrl.u32 %v107, 7
    %v109 = vsub.s32 0, %v108
    %v110 = vrot.slane %v105, %v109
    %vm112 = vcmask 441344
    %v114 = vsel %vm112, %v65, 0
    %vm116 = vcmask 1045504
    %v118 = vsel %vm116, %v104, 0
    %120 = vmatprep.subr.mxu0 0.0
    %121 = vmatpush1.msra.mxu0 %v81
    %122 = vmatprep.subr.mxu0 0.0
    %123 = vmatpush1.msra.mxu0 %v80
    %124 = vmatprep.subr.mxu0 0.0
    %125 = vmatpush1.msra.mxu0 %v79
    %126 = vmatprep.subr.mxu0 0.0
    %127 = vmatpush1.msra.mxu0 %v78
    %128 = vmatprep.subr.mxu0 0.0
    %129 = vmatpush1.msra.mxu0 %v77
    %130 = vmatprep.subr.mxu0 0.0
    %131 = vmatpush1.msra.mxu0 %v76
    %132 = vmatprep.subr.mxu0 0.0
    %133 = vmatpush1.msra.mxu0 %v75
    %134 = vmatprep.subr.mxu0 0.0
    %135 = vmatpush1.msra.mxu0 %v74
    %136 = vmatprep.subr.mxu0 0.0
    %137 = vmatpush1.msra.mxu0 %v73
    %138 = vmatprep.subr.mxu0 0.0
    %139 = vmatpush1.msra.mxu0 %v72
    %140 = vmatprep.subr.mxu0 0.0
    %141 = vmatpush1.msra.mxu0 %v71
    %142 = vmatprep.subr.mxu0 0.0
    %143 = vmatpush1.msra.mxu0 %v70
    %144 = vmatprep.subr.mxu0 0.0
    %145 = vmatpush1.msra.mxu0 %v69
    %146 = vmatprep.subr.mxu0 0.0
    %147 = vmatpush1.msra.mxu0 %v68
    %148 = vmatprep.subr.mxu0 0.0
    %149 = vmatpush1.msra.mxu0 %v67
    %150 = vmatprep.subr.mxu0 0.0
    %151 = vmatpush1.msra.mxu0 %v66
    %152 = vmatprep.subr.mxu0 0.0
    %153 = vmatpush2.msra.mxu0 %v97
    %154 = vmatprep.subr.mxu0 0.0
    %155 = vmatpush2.msra.mxu0 %v96
    %156 = vmatprep.subr.mxu0 0.0
    %157 = vmatpush2.msra.mxu0 %v95
    %158 = vmatprep.subr.mxu0 0.0
    %159 = vmatpush2.msra.mxu0 %v94
    %160 = vmatprep.subr.mxu0 0.0
    %161 = vmatpush2.msra.mxu0 %v93
    %162 = vmatprep.subr.mxu0 0.0
    %163 = vmatpush2.msra.mxu0 %v92
    %164 = vmatprep.subr.mxu0 0.0
    %165 = vmatpush2.msra.mxu0 %v91
    %166 = vmatprep.subr.mxu0 0.0
    %167 = vmatpush2.msra.mxu0 %v90
    %168 = vmatprep.subr.mxu0 0.0
    %169 = vmatpush2.msra.mxu0 %v89
    %170 = vmatprep.subr.mxu0 0.0
    %171 = vmatpush2.msra.mxu0 %v88
    %172 = vmatprep.subr.mxu0 0.0
    %173 = vmatpush2.msra.mxu0 %v87
    %174 = vmatprep.subr.mxu0 0.0
    %175 = vmatpush2.msra.mxu0 %v86
    %176 = vmatprep.subr.mxu0 0.0
    %177 = vmatpush2.msra.mxu0 %v85
    %178 = vmatprep.subr.mxu0 0.0
    %179 = vmatpush2.msra.mxu0 %v84
    %180 = vmatprep.subr.mxu0 0.0
    %181 = vmatpush2.msra.mxu0 %v83
    %182 = vmatprep.subr.mxu0 0.0
    %183 = vmatpush2.msra.mxu0 %v82
    %184 = vmatprep.mubr.f32.mxu0 %v64
    %185 = vmatmul.mubr.f32.gmra.mxu0 %v63
    %v186 = vpop.f32.mrf.mxu0
    %v187 = vadd.f32 %v110, %v186
    %v188 = vpop.f32.mrf.mxu0
    %189 = vdwg.mxu0
    %190 = vmatprep.subr.mxu0 0.0
    %191 = vmatpush1.msra.mxu0 0.0
    %192 = vmatprep.subr.mxu0 0.0
    %193 = vmatpush1.msra.mxu0 0.0
    %194 = vmatprep.subr.mxu0 0.0
    %195 = vmatpush1.msra.mxu0 0.0
    %196 = vmatprep.subr.mxu0 0.0
    %197 = vmatpush1.msra.mxu0 0.0
    %198 = vmatprep.subr.mxu0 0.0
    %199 = vmatpush1.msra.mxu0 0.0
    %200 = vmatprep.subr.mxu0 0.0
    %201 = vmatpush1.msra.mxu0 0.0
    %202 = vmatprep.subr.mxu0 0.0
    %203 = vmatpush1.msra.mxu0 0.0
    %204 = vmatprep.subr.mxu0 0.0
    %205 = vmatpush1.msra.mxu0 0.0
    %206 = vmatprep.subr.mxu0 0.0
    %207 = vmatpush1.msra.mxu0 0.0
    %208 = vmatprep.subr.mxu0 0.0
    %209 = vmatpush1.msra.mxu0 %v118
    %210 = vmatprep.subr.mxu0 0.0
    %211 = vmatpush1.msra.mxu0 %v103
    %212 = vmatprep.subr.mxu0 0.0
    %213 = vmatpush1.msra.mxu0 %v102
    %214 = vmatprep.subr.mxu0 0.0
    %215 = vmatpush1.msra.mxu0 %v101
    %216 = vmatprep.subr.mxu0 0.0
    %217 = vmatpush1.msra.mxu0 %v100
    %218 = vmatprep.subr.mxu0 0.0
    %219 = vmatpush1.msra.mxu0 %v99
    %220 = vmatprep.subr.mxu0 0.0
    %221 = vmatpush1.msra.mxu0 %v98
    %222 = vmatprep.subr.mxu0 0.0
    %223 = vmatpush2.msra.mxu0 0.0
    %224 = vmatprep.subr.mxu0 0.0
    %225 = vmatpush2.msra.mxu0 0.0
    %226 = vmatprep.subr.mxu0 0.0
    %227 = vmatpush2.msra.mxu0 0.0
    %228 = vmatprep.subr.mxu0 0.0
    %229 = vmatpush2.msra.mxu0 0.0
    %230 = vmatprep.subr.mxu0 0.0
    %231 = vmatpush2.msra.mxu0 0.0
    %232 = vmatprep.subr.mxu0 0.0
    %233 = vmatpush2.msra.mxu0 0.0
    %234 = vmatprep.subr.mxu0 0.0
    %235 = vmatpush2.msra.mxu0 0.0
    %236 = vmatprep.subr.mxu0 0.0
    %237 = vmatpush2.msra.mxu0 0.0
    %238 = vmatprep.subr.mxu0 0.0
    %239 = vmatpush2.msra.mxu0 0.0
    %240 = vmatprep.subr.mxu0 0.0
    %241 = vmatpush2.msra.mxu0 0.0
    %242 = vmatprep.subr.mxu0 0.0
    %243 = vmatpush2.msra.mxu0 0.0
    %244 = vmatprep.subr.mxu0 0.0
    %245 = vmatpush2.msra.mxu0 0.0
    %246 = vmatprep.subr.mxu0 0.0
    %247 = vmatpush2.msra.mxu0 0.0
    %248 = vmatprep.subr.mxu0 0.0
    %249 = vmatpush2.msra.mxu0 0.0
    %250 = vmatprep.subr.mxu0 0.0
    %251 = vmatpush2.msra.mxu0 0.0
    %252 = vmatprep.subr.mxu0 0.0
    %253 = vmatpush2.msra.mxu0 0.0
    %254 = vmatprep.mubr.f32.mxu0 0.0
    %255 = vmatmul.mubr.f32.gmra.mxu0 %v114
    %v256 = vpop.f32.mrf.mxu0
    %v257 = vadd.f32 %v187, %v256
    %v258 = vpop.f32.mrf.mxu0
    %259 = vdwg.mxu0
    %v260 = vmax.f32 %v257, 0.0
    %261 = vst [vmem:[#allocation8] sm:$0xff] %v260
    %v262 = vld [vmem:[#allocation7] sm:$0xff]
    %v263 = vld [vmem:[#allocation7 + $0x8] sm:$0xff]
    %v264 = vld [vmem:[#allocation7 + $0x10] sm:$0xff]
    %v265 = vld [vmem:[#allocation7 + $0x18] sm:$0xff]
    %v266 = vld [vmem:[#allocation7 + $0x20] sm:$0xff]
    %v267 = vld [vmem:[#allocation7 + $0x28] sm:$0xff]
    %v268 = vld [vmem:[#allocation7 + $0x30] sm:$0xff]
    %v269 = vld [vmem:[#allocation7 + $0x38] sm:$0xff]
    %v270 = vld [vmem:[#allocation7 + $0x40] sm:$0xff]
    %v271 = vld [vmem:[#allocation7 + $0x48] sm:$0xff]
    %v272 = vld [vmem:[#allocation7 + $0x50] sm:$0xff]
    %v273 = vld [vmem:[#allocation7 + $0x58] sm:$0xff]
    %v274 = vld [vmem:[#allocation7 + $0x60] sm:$0xff]
    %v275 = vld [vmem:[#allocation7 + $0x68] sm:$0xff]
    %v276 = vld [vmem:[#allocation7 + $0x70] sm:$0xff]
    %v277 = vld [vmem:[#allocation7 + $0x78] sm:$0xff]
    %v278 = vld [vmem:[%s4] sm:$0x1]
    %v280 = vlaneseq
    %v281 = vshrl.u32 %v280, 7
    %v282 = vsub.s32 0, %v281
    %v283 = vrot.slane %v278, %v282
    %285 = vmatprep.subr.mxu0 0.0
    %286 = vmatpush1.msra.mxu0 %v277
    %287 = vmatprep.subr.mxu0 0.0
    %288 = vmatpush1.msra.mxu0 %v276
    %289 = vmatprep.subr.mxu0 0.0
    %290 = vmatpush1.msra.mxu0 %v275
    %291 = vmatprep.subr.mxu0 0.0
    %292 = vmatpush1.msra.mxu0 %v274
    %293 = vmatprep.subr.mxu0 0.0
    %294 = vmatpush1.msra.mxu0 %v273
    %295 = vmatprep.subr.mxu0 0.0
    %296 = vmatpush1.msra.mxu0 %v272
    %297 = vmatprep.subr.mxu0 0.0
    %298 = vmatpush1.msra.mxu0 %v271
    %299 = vmatprep.subr.mxu0 0.0
    %300 = vmatpush1.msra.mxu0 %v270
    %301 = vmatprep.subr.mxu0 0.0
    %302 = vmatpush1.msra.mxu0 %v269
    %303 = vmatprep.subr.mxu0 0.0
    %304 = vmatpush1.msra.mxu0 %v268
    %305 = vmatprep.subr.mxu0 0.0
    %306 = vmatpush1.msra.mxu0 %v267
    %307 = vmatprep.subr.mxu0 0.0
    %308 = vmatpush1.msra.mxu0 %v266
    %309 = vmatprep.subr.mxu0 0.0
    %310 = vmatpush1.msra.mxu0 %v265
    %311 = vmatprep.subr.mxu0 0.0
    %312 = vmatpush1.msra.mxu0 %v264
    %313 = vmatprep.subr.mxu0 0.0
    %314 = vmatpush1.msra.mxu0 %v263
    %315 = vmatprep.subr.mxu0 0.0
    %316 = vmatpush1.msra.mxu0 %v262
    %317 = vmatprep.subr.mxu0 0.0
    %318 = vmatpush2.msra.mxu0 0.0
    %319 = vmatprep.subr.mxu0 0.0
    %320 = vmatpush2.msra.mxu0 0.0
    %321 = vmatprep.subr.mxu0 0.0
    %322 = vmatpush2.msra.mxu0 0.0
    %323 = vmatprep.subr.mxu0 0.0
    %324 = vmatpush2.msra.mxu0 0.0
    %325 = vmatprep.subr.mxu0 0.0
    %326 = vmatpush2.msra.mxu0 0.0
    %327 = vmatprep.subr.mxu0 0.0
    %328 = vmatpush2.msra.mxu0 0.0
    %329 = vmatprep.subr.mxu0 0.0
    %330 = vmatpush2.msra.mxu0 0.0
    %331 = vmatprep.subr.mxu0 0.0
    %332 = vmatpush2.msra.mxu0 0.0
    %333 = vmatprep.subr.mxu0 0.0
    %334 = vmatpush2.msra.mxu0 0.0
    %335 = vmatprep.subr.mxu0 0.0
    %336 = vmatpush2.msra.mxu0 0.0
    %337 = vmatprep.subr.mxu0 0.0
    %338 = vmatpush2.msra.mxu0 0.0
    %339 = vmatprep.subr.mxu0 0.0
    %340 = vmatpush2.msra.mxu0 0.0
    %341 = vmatprep.subr.mxu0 0.0
    %342 = vmatpush2.msra.mxu0 0.0
    %343 = vmatprep.subr.mxu0 0.0
    %344 = vmatpush2.msra.mxu0 0.0
    %345 = vmatprep.subr.mxu0 0.0
    %346 = vmatpush2.msra.mxu0 0.0
    %347 = vmatprep.subr.mxu0 0.0
    %348 = vmatpush2.msra.mxu0 0.0
    %349 = vmatprep.mubr.f32.mxu0 0.0
    %350 = vmatmul.mubr.f32.gmra.mxu0 %v260
    %v351 = vpop.f32.mrf.mxu0
    %v352 = vadd.f32 %v283, %v351
    %v353 = vpop.f32.mrf.mxu0
    %354 = vdwg.mxu0
    %v355 = vmul.f32 %v352, 0.5
    %v356 = vtanh.pop %v355
    %v357 = vadd.f32 %v356, 1.0
    %v358 = vmul.f32 %v357, 0.5
    %359 = vst [vmem:[#allocation9] sm:$0xff] %v358
    // Predicated region
    $region34: #{tpu_custom_call.1} parent=1 // pred_check
      _
    $region35: #{tpu_custom_call.1} parent=1 // pred_check_branch
      %361 = sbr.rel (0) target = $region37
    $region36: #{tpu_custom_call.1} parent=1 // pred_region
      %s363 = ssub.s32 128, 128
      %364 = vsyncadd [#allocation4], %s363
      %s366 = sshll.u32 [#allocation8], 4
      %s367 = int_to_ptr.vmem [resolvable:$true] %s366
      %369 = dma.vmem_to_hbm [thread:$0]  %s367, 128, %s5, [#allocation4]
    $region37: #{tpu_custom_call.1} parent=1 // pred_fallthru
      _
    // Predicated region
    $region38: #{tpu_custom_call.1} parent=1 // pred_check
      _
    $region39: #{tpu_custom_call.1} parent=1 // pred_check_branch
      %371 = sbr.rel (0) target = $region41
    $region40: #{tpu_custom_call.1} parent=1 // pred_region
      %s373 = ssub.s32 128, 128
      %374 = vsyncadd [#allocation10], %s373
      %s376 = sshll.u32 [#allocation9], 4
      %s377 = int_to_ptr.vmem [resolvable:$true] %s376
      %379 = dma.vmem_to_hbm [thread:$0]  %s377, 128, %s6, [#allocation10]
    $region41: #{tpu_custom_call.1} parent=1 // pred_fallthru
      _
    // Predicated region
    $region42: #{tpu_custom_call.1} parent=1 // pred_check
      _
    $region43: #{tpu_custom_call.1} parent=1 // pred_check_branch
      %381 = sbr.rel (0) target = $region45
    $region44: #{tpu_custom_call.1} parent=1 // pred_region
      %382 = dma.done [#allocation4], 128
    $region45: #{tpu_custom_call.1} parent=1 // pred_fallthru
      _
    // Predicated region
    $region46: #{tpu_custom_call.1} parent=1 // pred_check
      _
    $region47: #{tpu_custom_call.1} parent=1 // pred_check_branch
      %384 = sbr.rel (0) target = $region49
    $region48: #{tpu_custom_call.1} parent=1 // pred_region
      %385 = dma.done [#allocation10], 128
    $region49: #{tpu_custom_call.1} parent=1 // pred_fallthru
      _
    %386 = vsyncpa [#allocation3], 1
    %387 = vsyncpa [#allocation6], 1
    %388 = vsyncpa [#allocation4], 1
    %389 = vsyncpa [#allocation10], 1

</llo_original>
